<compile_context>
chip_gen: v7x
topology: tpu7x:2x2x1
jax: 0.10.0
libtpu: 0.0.40
codegen_flags: <defaults>
</compile_context>

<pallas_src>
import jax
import jax.numpy as jnp
from jax.experimental import pallas as pl
from jax.experimental.pallas import tpu as pltpu

C = 62            # in_planes
RATIO = 4
H = C // RATIO    # 15


# ----------------------------------------------------------------------------
# Fused ChannelAttention kernel
# ----------------------------------------------------------------------------
def channel_attention_kernel(x_ref, w1_ref, w2_ref, o_ref):
    # x_ref:  (B, C, L)  input
    # w1_ref: (H, C)     fc1 weight (1x1 conv, no bias)
    # w2_ref: (C, H)     fc2 weight (1x1 conv, no bias)
    # o_ref:  (B, C, L)  gated output
    B = x_ref.shape[0]

    # Load each batch slab once and reuse for pools + final multiply.
    xs = [x_ref[b] for b in range(B)]                       # each (C, L)

    # Pools over the length (lane) axis, built directly in (C, 2B) layout:
    #   columns [0, B)  : avg-pool per batch,  columns [B, 2B) : max-pool.
    # Channels stay on the sublane axis so the MLP below contracts over C
    # without any transpose.
    avg_cols = [jnp.mean(xb, axis=1, keepdims=True) for xb in xs]   # (C, 1)
    max_cols = [jnp.max(xb, axis=1, keepdims=True) for xb in xs]    # (C, 1)
    pooled = jnp.concatenate(avg_cols + max_cols, axis=1)           # (C, 2B)

    # Shared MLP fc2(relu(fc1(.))) on all 2B pooled columns in one MXU pass.
    h = jnp.dot(w1_ref[...], pooled, preferred_element_type=jnp.float32)  # (H, 2B)
    h = jnp.maximum(h, 0.0)
    out = jnp.dot(w2_ref[...], h, preferred_element_type=jnp.float32)     # (C, 2B)

    # Gate: sigmoid(avg_branch + max_branch), then broadcast over length.
    att = jax.nn.sigmoid(out[:, :B] + out[:, B:])                   # (C, B)
    for b in range(B):
        o_ref[b] = xs[b] * att[:, b:b + 1]                          # lane-broadcast


# ----------------------------------------------------------------------------
# pallas_call wrapper — whole problem fits in VMEM, single block, no grid
# ----------------------------------------------------------------------------
def channel_attention(x, w1, w2):
    vmem = pl.BlockSpec(memory_space=pltpu.MemorySpace.VMEM)
    return pl.pallas_call(
        channel_attention_kernel,
        out_shape=jax.ShapeDtypeStruct(x.shape, x.dtype),
        in_specs=[vmem, vmem, vmem],
        out_specs=vmem,
    )(x, w1, w2)


# ----------------------------------------------------------------------------
# Pure-JAX reference (for correctness check)
# ----------------------------------------------------------------------------
def channel_attention_ref(x, w1, w2):
    avg = jnp.mean(x, axis=2, keepdims=True)                 # (B, C, 1)
    mx = jnp.max(x, axis=2, keepdims=True)                   # (B, C, 1)

    def mlp(v):
        hh = jnp.einsum('hc,bcl->bhl', w1, v)
        hh = jnp.maximum(hh, 0.0)
        return jnp.einsum('ch,bhl->bcl', w2, hh)

    gate = jax.nn.sigmoid(mlp(avg) + mlp(mx))                # (B, C, 1)
    return gate * x


if __name__ == "__main__":
    key = jax.random.PRNGKey(0)
    kx, k1, k2 = jax.random.split(key, 3)

    B, L = 2, 16
    x = jax.random.normal(kx, (B, C, L), jnp.float32)

    # fc1 / fc2 weights (PyTorch Conv1d default uniform init, kernel_size=1)
    b1 = 1.0 / float(C) ** 0.5
    b2 = 1.0 / float(H) ** 0.5
    w1 = jax.random.uniform(k1, (H, C), jnp.float32, -b1, b1)
    w2 = jax.random.uniform(k2, (C, H), jnp.float32, -b2, b2)

    out = jax.jit(channel_attention)(x, w1, w2)
    out = jax.block_until_ready(out)

    ref = channel_attention_ref(x, w1, w2)
    assert out.shape == (B, C, L), out.shape
    assert bool(jnp.all(jnp.isfinite(out)))
    assert bool(jnp.allclose(out, ref, atol=1e-5, rtol=1e-5))
    print("KERNEL_OK")
</pallas_src>

<mosaic_0001>
module attributes {stable_mosaic.version = 11 : i64} {
  func.func @channel_attention_kernel(%arg0: memref<2x62x16xf32, #tpu.memory_space<vmem>>, %arg1: memref<15x62xf32, #tpu.memory_space<vmem>>, %arg2: memref<62x15xf32, #tpu.memory_space<vmem>>, %arg3: memref<2x62x16xf32, #tpu.memory_space<vmem>>) attributes {dimension_semantics = [], scalar_prefetch = 0 : i64, scratch_operands = 0 : i64, tpu.core_type = #tpu.core_type<tc>} {
    %c0 = arith.constant 0 : index
    %c0_0 = arith.constant 0 : index
    %c0_1 = arith.constant 0 : index
    %0 = vector.load %arg0[%c0, %c0_0, %c0_1] : memref<2x62x16xf32, #tpu.memory_space<vmem>>, vector<1x62x16xf32>
    %1 = vector.shape_cast %0 : vector<1x62x16xf32> to vector<62x16xf32>
    %c1 = arith.constant 1 : index
    %c0_2 = arith.constant 0 : index
    %c0_3 = arith.constant 0 : index
    %2 = vector.load %arg0[%c1, %c0_2, %c0_3] : memref<2x62x16xf32, #tpu.memory_space<vmem>>, vector<1x62x16xf32>
    %3 = vector.shape_cast %2 : vector<1x62x16xf32> to vector<62x16xf32>
    %cst = arith.constant dense<0.000000e+00> : vector<62xf32>
    %4 = vector.multi_reduction <add>, %1, %cst [1] : vector<62x16xf32> to vector<62xf32>
    %5 = vector.shape_cast %4 : vector<62xf32> to vector<62x1xf32>
    %cst_4 = arith.constant 1.600000e+01 : f32
    %6 = vector.broadcast %cst_4 : f32 to vector<62x1xf32>
    %7 = arith.divf %5, %6 : vector<62x1xf32>
    %cst_5 = arith.constant dense<0.000000e+00> : vector<62xf32>
    %8 = vector.multi_reduction <add>, %3, %cst_5 [1] : vector<62x16xf32> to vector<62xf32>
    %9 = vector.shape_cast %8 : vector<62xf32> to vector<62x1xf32>
    %cst_6 = arith.constant 1.600000e+01 : f32
    %10 = vector.broadcast %cst_6 : f32 to vector<62x1xf32>
    %11 = arith.divf %9, %10 : vector<62x1xf32>
    %cst_7 = arith.constant dense<0xFF800000> : vector<62xf32>
    %12 = vector.multi_reduction <maximumf>, %1, %cst_7 [1] : vector<62x16xf32> to vector<62xf32>
    %13 = vector.shape_cast %12 : vector<62xf32> to vector<62x1xf32>
    %cst_8 = arith.constant dense<0xFF800000> : vector<62xf32>
    %14 = vector.multi_reduction <maximumf>, %3, %cst_8 [1] : vector<62x16xf32> to vector<62xf32>
    %15 = vector.shape_cast %14 : vector<62xf32> to vector<62x1xf32>
    %16 = tpu.concatenate %7, %11, %13, %15 in 1 : vector<62x1xf32>, vector<62x1xf32>, vector<62x1xf32>, vector<62x1xf32> -> vector<62x4xf32>
    %c0_9 = arith.constant 0 : index
    %c0_10 = arith.constant 0 : index
    %17 = vector.load %arg1[%c0_9, %c0_10] : memref<15x62xf32, #tpu.memory_space<vmem>>, vector<15x62xf32>
    %cst_11 = arith.constant dense<0.000000e+00> : vector<15x4xf32>
    %18 = tpu.matmul %17, %16, %cst_11 {dimension_numbers = #tpu.dot_dimension_numbers<[1], [0], [0], [1], [0, 0, 1, 1], [], []>} : vector<15x62xf32>, vector<62x4xf32>, vector<15x4xf32> -> vector<15x4xf32>
    %cst_12 = arith.constant 0.000000e+00 : f32
    %19 = vector.broadcast %cst_12 : f32 to vector<15x4xf32>
    %20 = arith.maximumf %18, %19 : vector<15x4xf32>
    %c0_13 = arith.constant 0 : index
    %c0_14 = arith.constant 0 : index
    %21 = vector.load %arg2[%c0_13, %c0_14] : memref<62x15xf32, #tpu.memory_space<vmem>>, vector<62x15xf32>
    %cst_15 = arith.constant dense<0.000000e+00> : vector<62x4xf32>
    %22 = tpu.matmul %21, %20, %cst_15 {dimension_numbers = #tpu.dot_dimension_numbers<[1], [0], [0], [1], [0, 0, 1, 1], [], []>} : vector<62x15xf32>, vector<15x4xf32>, vector<62x4xf32> -> vector<62x4xf32>
    %23 = vector.extract_strided_slice %22 {offsets = [0, 0], sizes = [62, 2], strides = [1, 1]} : vector<62x4xf32> to vector<62x2xf32>
    %24 = vector.extract_strided_slice %22 {offsets = [0, 2], sizes = [62, 2], strides = [1, 1]} : vector<62x4xf32> to vector<62x2xf32>
    %25 = arith.addf %23, %24 : vector<62x2xf32>
    %26 = arith.negf %25 : vector<62x2xf32>
    %27 = math.exp %26 : vector<62x2xf32>
    %cst_16 = arith.constant 1.000000e+00 : f32
    %28 = vector.broadcast %cst_16 : f32 to vector<62x2xf32>
    %29 = arith.addf %28, %27 : vector<62x2xf32>
    %30 = arith.divf %28, %29 : vector<62x2xf32>
    %31 = vector.extract_strided_slice %30 {offsets = [0, 0], sizes = [62, 1], strides = [1, 1]} : vector<62x2xf32> to vector<62x1xf32>
    %32 = vector.broadcast %31 : vector<62x1xf32> to vector<62x16xf32>
    %33 = arith.mulf %1, %32 : vector<62x16xf32>
    %c0_17 = arith.constant 0 : index
    %c0_18 = arith.constant 0 : index
    %c0_19 = arith.constant 0 : index
    %34 = vector.load %arg3[%c0_17, %c0_18, %c0_19] : memref<2x62x16xf32, #tpu.memory_space<vmem>>, vector<1x62x16xf32>
    %35 = vector.shape_cast %34 : vector<1x62x16xf32> to vector<62x16xf32>
    %36 = vector.shape_cast %33 : vector<62x16xf32> to vector<1x62x16xf32>
    tpu.vector_store %arg3[%c0_17, %c0_18, %c0_19], %36 {strides = array<i32>} : memref<2x62x16xf32, #tpu.memory_space<vmem>>, vector<1x62x16xf32>,
    %37 = vector.extract_strided_slice %30 {offsets = [0, 1], sizes = [62, 1], strides = [1, 1]} : vector<62x2xf32> to vector<62x1xf32>
    %38 = vector.broadcast %37 : vector<62x1xf32> to vector<62x16xf32>
    %39 = arith.mulf %3, %38 : vector<62x16xf32>
    %c1_20 = arith.constant 1 : index
    %c0_21 = arith.constant 0 : index
    %c0_22 = arith.constant 0 : index
    %40 = vector.load %arg3[%c1_20, %c0_21, %c0_22] : memref<2x62x16xf32, #tpu.memory_space<vmem>>, vector<1x62x16xf32>
    %41 = vector.shape_cast %40 : vector<1x62x16xf32> to vector<62x16xf32>
    %42 = vector.shape_cast %39 : vector<62x16xf32> to vector<1x62x16xf32>
    tpu.vector_store %arg3[%c1_20, %c0_21, %c0_22], %42 {strides = array<i32>} : memref<2x62x16xf32, #tpu.memory_space<vmem>>, vector<1x62x16xf32>,
    return
  }
}

</mosaic_0001>

<llo_original>
// kernel: channel_attention.1
$region0: #{channel_attention.1}
  #allocation0 [shape = 'u32[]', space=smem, size = 0x4, offset = 0x4, fixed_abs, tag = 'smem constant byte address 0x4 - core index']
  #allocation1 [shape = 'u32[144,128]{1,0:T(1,128)}', space=vmem, size = 0x12000, scoped, tag = 'internal scratch']
  %s0 = inlined_call_operand.vmem [shape: f32[2,62,16], index: 0, kind: input, shape index: {}]
  %s1 = inlined_call_operand.vmem [shape: f32[15,62], index: 1, kind: input, shape index: {}]
  %s2 = inlined_call_operand.vmem [shape: f32[62,15], index: 2, kind: input, shape index: {}]
  %s3 = inlined_call_operand.vmem [shape: f32[2,62,16], index: 3, kind: output, shape index: {}]
  %s4 = sld [smem:[#allocation0]]
  $region22: #{channel_attention.1} parent=0
    _
  %s6 = ssub.s32 1, %s4
  %s7 = scalar_select 0, %s6, %s4
  // Predicated region
  $region2: #{channel_attention.1} parent=0 // pred_check
    _
  $region3: #{channel_attention.1} parent=0 // pred_check_branch
    %9 = sbr.rel (0) target = $region5
  $region4: #{channel_attention.1} parent=0 // pred_region
    _
  $region5: #{channel_attention.1} parent=0 // pred_fallthru
    _
  // Predicated region
  $region6: #{channel_attention.1} parent=0 // pred_check
    _
  $region7: #{channel_attention.1} parent=0 // pred_check_branch
    %11 = sbr.rel (0) target = $region9
  $region8: #{channel_attention.1} parent=0 // pred_region
    _
  $region9: #{channel_attention.1} parent=0 // pred_fallthru
    _
  // Predicated region
  $region10: #{channel_attention.1} parent=0 // pred_check
    _
  $region11: #{channel_attention.1} parent=0 // pred_check_branch
    %13 = sbr.rel (0) target = $region13
  $region12: #{channel_attention.1} parent=0 // pred_region
    _
  $region13: #{channel_attention.1} parent=0 // pred_fallthru
    _
  %v14 = vld [vmem:[%s0] sm:$0xff]
  %v15 = vld [vmem:[%s0 + $0x8] sm:$0xff]
  %v16 = vld [vmem:[%s0 + $0x10] sm:$0xff]
  %v17 = vld [vmem:[%s0 + $0x18] sm:$0xff]
  %v18 = vld [vmem:[%s0 + $0x20] sm:$0xff]
  %v19 = vld [vmem:[%s0 + $0x28] sm:$0xff]
  %v20 = vld [vmem:[%s0 + $0x30] sm:$0xff]
  %v21 = vld [vmem:[%s0 + $0x38] sm:$0x3f]
  %s22 = scalar_lea.vmem %s0, 64
  %v23 = vld [vmem:[%s22] sm:$0xff]
  %v24 = vld [vmem:[%s22 + $0x8] sm:$0xff]
  %v25 = vld [vmem:[%s22 + $0x10] sm:$0xff]
  %v26 = vld [vmem:[%s22 + $0x18] sm:$0xff]
  %v27 = vld [vmem:[%s22 + $0x20] sm:$0xff]
  %v28 = vld [vmem:[%s22 + $0x28] sm:$0xff]
  %v29 = vld [vmem:[%s22 + $0x30] sm:$0xff]
  %v30 = vld [vmem:[%s22 + $0x38] sm:$0x3f]
  %vm31 = vcmask 130048
  %v32 = vsel %vm31, %v14, 0.0
  %33 = vadd.xlane.f32.xlu0 %v32
  %v34 = vpop.xlane.xlu0 %33
  %v35 = vsel %vm31, %v15, 0.0
  %36 = vadd.xlane.f32.xlu0 %v35
  %v37 = vpop.xlane.xlu0 %36
  %v38 = vsel %vm31, %v16, 0.0
  %39 = vadd.xlane.f32.xlu0 %v38
  %v40 = vpop.xlane.xlu0 %39
  %v41 = vsel %vm31, %v17, 0.0
  %42 = vadd.xlane.f32.xlu0 %v41
  %v43 = vpop.xlane.xlu0 %42
  %v44 = vsel %vm31, %v18, 0.0
  %45 = vadd.xlane.f32.xlu0 %v44
  %v46 = vpop.xlane.xlu0 %45
  %v47 = vsel %vm31, %v19, 0.0
  %48 = vadd.xlane.f32.xlu0 %v47
  %v49 = vpop.xlane.xlu0 %48
  %v50 = vsel %vm31, %v20, 0.0
  %51 = vadd.xlane.f32.xlu0 %v50
  %v52 = vpop.xlane.xlu0 %51
  %vm53 = vcmask 128000
  %v54 = vsel %vm53, %v21, 0.0
  %55 = vadd.xlane.f32.xlu0 %v54
  %v56 = vpop.xlane.xlu0 %55
  %v57 = vrcp.pop 16.0
  %v58 = vmul.f32 %v34, %v57
  %v59 = vmul.f32 %v37, %v57
  %v60 = vmul.f32 %v40, %v57
  %v61 = vmul.f32 %v43, %v57
  %v62 = vmul.f32 %v46, %v57
  %v63 = vmul.f32 %v49, %v57
  %v64 = vmul.f32 %v52, %v57
  %v65 = vmul.f32 %v56, %v57
  %v66 = vsel %vm31, %v23, 0.0
  %67 = vadd.xlane.f32.xlu0 %v66
  %v68 = vpop.xlane.xlu0 %67
  %v69 = vsel %vm31, %v24, 0.0
  %70 = vadd.xlane.f32.xlu0 %v69
  %v71 = vpop.xlane.xlu0 %70
  %v72 = vsel %vm31, %v25, 0.0
  %73 = vadd.xlane.f32.xlu0 %v72
  %v74 = vpop.xlane.xlu0 %73
  %v75 = vsel %vm31, %v26, 0.0
  %76 = vadd.xlane.f32.xlu0 %v75
  %v77 = vpop.xlane.xlu0 %76
  %v78 = vsel %vm31, %v27, 0.0
  %79 = vadd.xlane.f32.xlu0 %v78
  %v80 = vpop.xlane.xlu0 %79
  %v81 = vsel %vm31, %v28, 0.0
  %82 = vadd.xlane.f32.xlu0 %v81
  %v83 = vpop.xlane.xlu0 %82
  %v84 = vsel %vm31, %v29, 0.0
  %85 = vadd.xlane.f32.xlu0 %v84
  %v86 = vpop.xlane.xlu0 %85
  %v87 = vsel %vm53, %v30, 0.0
  %88 = vadd.xlane.f32.xlu0 %v87
  %v89 = vpop.xlane.xlu0 %88
  %v90 = vmul.f32 %v68, %v57
  %v91 = vmul.f32 %v71, %v57
  %v92 = vmul.f32 %v74, %v57
  %v93 = vmul.f32 %v77, %v57
  %v94 = vmul.f32 %v80, %v57
  %v95 = vmul.f32 %v83, %v57
  %v96 = vmul.f32 %v86, %v57
  %v97 = vmul.f32 %v89, %v57
  %v98 = vsel %vm31, %v14, -inf
  %99 = vmax.xlane.f32.xlu0 %v98
  %v100 = vpop.xlane.xlu0 %99
  %v101 = vsel %vm31, %v15, -inf
  %102 = vmax.xlane.f32.xlu0 %v101
  %v103 = vpop.xlane.xlu0 %102
  %v104 = vsel %vm31, %v16, -inf
  %105 = vmax.xlane.f32.xlu0 %v104
  %v106 = vpop.xlane.xlu0 %105
  %v107 = vsel %vm31, %v17, -inf
  %108 = vmax.xlane.f32.xlu0 %v107
  %v109 = vpop.xlane.xlu0 %108
  %v110 = vsel %vm31, %v18, -inf
  %111 = vmax.xlane.f32.xlu0 %v110
  %v112 = vpop.xlane.xlu0 %111
  %v113 = vsel %vm31, %v19, -inf
  %114 = vmax.xlane.f32.xlu0 %v113
  %v115 = vpop.xlane.xlu0 %114
  %v116 = vsel %vm31, %v20, -inf
  %117 = vmax.xlane.f32.xlu0 %v116
  %v118 = vpop.xlane.xlu0 %117
  %v119 = vsel %vm53, %v21, -inf
  %120 = vmax.xlane.f32.xlu0 %v119
  %v121 = vpop.xlane.xlu0 %120
  %v122 = vsel %vm31, %v23, -inf
  %123 = vmax.xlane.f32.xlu0 %v122
  %v124 = vpop.xlane.xlu0 %123
  %v125 = vsel %vm31, %v24, -inf
  %126 = vmax.xlane.f32.xlu0 %v125
  %v127 = vpop.xlane.xlu0 %126
  %v128 = vsel %vm31, %v25, -inf
  %129 = vmax.xlane.f32.xlu0 %v128
  %v130 = vpop.xlane.xlu0 %129
  %v131 = vsel %vm31, %v26, -inf
  %132 = vmax.xlane.f32.xlu0 %v131
  %v133 = vpop.xlane.xlu0 %132
  %v134 = vsel %vm31, %v27, -inf
  %135 = vmax.xlane.f32.xlu0 %v134
  %v136 = vpop.xlane.xlu0 %135
  %v137 = vsel %vm31, %v28, -inf
  %138 = vmax.xlane.f32.xlu0 %v137
  %v139 = vpop.xlane.xlu0 %138
  %v140 = vsel %vm31, %v29, -inf
  %141 = vmax.xlane.f32.xlu0 %v140
  %v142 = vpop.xlane.xlu0 %141
  %v143 = vsel %vm53, %v30, -inf
  %144 = vmax.xlane.f32.xlu0 %v143
  %v145 = vpop.xlane.xlu0 %144
  %vm146 = vcmask 7168
  %v147 = vsel %vm146, %v58, %v90
  %v148 = vsel %vm146, %v59, %v91
  %v149 = vsel %vm146, %v60, %v92
  %v150 = vsel %vm146, %v61, %v93
  %v151 = vsel %vm146, %v62, %v94
  %v152 = vsel %vm146, %v63, %v95
  %v153 = vsel %vm146, %v64, %v96
  %v154 = vsel %vm146, %v65, %v97
  %vm155 = vcmask 15360
  %v156 = vsel %vm155, %v147, %v100
  %v157 = vsel %vm155, %v148, %v103
  %v158 = vsel %vm155, %v149, %v106
  %v159 = vsel %vm155, %v150, %v109
  %v160 = vsel %vm155, %v151, %v112
  %v161 = vsel %vm155, %v152, %v115
  %v162 = vsel %vm155, %v153, %v118
  %v163 = vsel %vm155, %v154, %v121
  %vm164 = vcmask 23552
  %v165 = vsel %vm164, %v156, %v124
  %v166 = vsel %vm164, %v157, %v127
  %v167 = vsel %vm164, %v158, %v130
  %v168 = vsel %vm164, %v159, %v133
  %v169 = vsel %vm164, %v160, %v136
  %v170 = vsel %vm164, %v161, %v139
  %v171 = vsel %vm164, %v162, %v142
  %v172 = vsel %vm164, %v163, %v145
  %v173 = vld [vmem:[%s1] sm:$0xff]
  %v174 = vld [vmem:[%s1 + $0x8] sm:$0x7f]
  %vm175 = vcmask 506880
  %v177 = vsel %vm175, %v173, 0
  %v180 = vsel %vm175, %v174, 0
  %vm182 = vcmask 1045504
  %v184 = vsel %vm182, %v172, 0
  %186 = vmatprep.subr.mxu0 0.0
  %187 = vmatpush1.msra.mxu0 %v165
  %188 = vmatprep.subr.mxu0 0.0
  %189 = vmatpush1.msra.mxu0 %v166
  %190 = vmatprep.subr.mxu0 0.0
  %191 = vmatpush1.msra.mxu0 %v167
  %192 = vmatprep.subr.mxu0 0.0
  %193 = vmatpush1.msra.mxu0 %v168
  %194 = vmatprep.subr.mxu0 0.0
  %195 = vmatpush1.msra.mxu0 %v169
  %196 = vmatprep.subr.mxu0 0.0
  %197 = vmatpush1.msra.mxu0 %v170
  %198 = vmatprep.subr.mxu0 0.0
  %199 = vmatpush1.msra.mxu0 %v171
  %200 = vmatprep.subr.mxu0 0.0
  %201 = vmatpush1.msra.mxu0 %v184
  %202 = vmatprep.subr.mxu0 0.0
  %203 = vmatpush1.msra.mxu0 0.0
  %204 = vmatprep.subr.mxu0 0.0
  %205 = vmatpush1.msra.mxu0 0.0
  %206 = vmatprep.subr.mxu0 0.0
  %207 = vmatpush1.msra.mxu0 0.0
  %208 = vmatprep.subr.mxu0 0.0
  %209 = vmatpush1.msra.mxu0 0.0
  %210 = vmatprep.subr.mxu0 0.0
  %211 = vmatpush1.msra.mxu0 0.0
  %212 = vmatprep.subr.mxu0 0.0
  %213 = vmatpush1.msra.mxu0 0.0
  %214 = vmatprep.subr.mxu0 0.0
  %215 = vmatpush1.msra.mxu0 0.0
  %216 = vmatprep.subr.mxu0 0.0
  %217 = vmatpush1.msra.mxu0 0.0
  %218 = vmatprep.subr.mxu0 0.0
  %219 = vmatpush1.msra.mxu0 0.0
  %220 = vmatprep.subr.mxu0 0.0
  %221 = vmatpush1.msra.mxu0 0.0
  %222 = vmatprep.subr.mxu0 0.0
  %223 = vmatpush1.msra.mxu0 0.0
  %224 = vmatprep.subr.mxu0 0.0
  %225 = vmatpush1.msra.mxu0 0.0
  %226 = vmatprep.subr.mxu0 0.0
  %227 = vmatpush1.msra.mxu0 0.0
  %228 = vmatprep.subr.mxu0 0.0
  %229 = vmatpush1.msra.mxu0 0.0
  %230 = vmatprep.subr.mxu0 0.0
  %231 = vmatpush1.msra.mxu0 0.0
  %232 = vmatprep.subr.mxu0 0.0
  %233 = vmatpush1.msra.mxu0 0.0
  %234 = vmatprep.subr.mxu0 0.0
  %235 = vmatpush1.msra.mxu0 0.0
  %236 = vmatprep.subr.mxu0 0.0
  %237 = vmatpush1.msra.mxu0 0.0
  %238 = vmatprep.subr.mxu0 0.0
  %239 = vmatpush1.msra.mxu0 0.0
  %240 = vmatprep.subr.mxu0 0.0
  %241 = vmatpush1.msra.mxu0 0.0
  %242 = vmatprep.subr.mxu0 0.0
  %243 = vmatpush1.msra.mxu0 0.0
  %244 = vmatprep.subr.mxu0 0.0
  %245 = vmatpush1.msra.mxu0 0.0
  %246 = vmatprep.subr.mxu0 0.0
  %247 = vmatpush1.msra.mxu0 0.0
  %248 = vmatprep.subr.mxu0 0.0
  %249 = vmatpush1.msra.mxu0 0.0
  %250 = vmatprep.mubr.f32.mxu0 0.0
  %251 = vmatmul.mubr.f32.gmra.mrb[0].mxu0 %v177
  %v252 = vpop.f32.mrb[0].mxu0
  %v253 = vadd.f32 0.0, %v252
  %v254 = vpop.f32.mrb[0].mxu0
  %255 = vmatprep.mubr.f32.mxu0 0.0
  %256 = vmatmul.mubr.f32.gmra.mrb[0].mxu0 %v180
  %v257 = vpop.f32.mrb[0].mxu0
  %v258 = vadd.f32 0.0, %v257
  %v259 = vpop.f32.mrb[0].mxu0
  %260 = vdwg.mxu0
  %v261 = vmax.f32 %v253, 0.0
  %v262 = vmax.f32 %v258, 0.0
  %v263 = vld [vmem:[%s2] sm:$0xff]
  %v264 = vld [vmem:[%s2 + $0x8] sm:$0xff]
  %v265 = vld [vmem:[%s2 + $0x10] sm:$0xff]
  %v266 = vld [vmem:[%s2 + $0x18] sm:$0xff]
  %v267 = vld [vmem:[%s2 + $0x20] sm:$0xff]
  %v268 = vld [vmem:[%s2 + $0x28] sm:$0xff]
  %v269 = vld [vmem:[%s2 + $0x30] sm:$0xff]
  %v270 = vld [vmem:[%s2 + $0x38] sm:$0x3f]
  %vm271 = vcmask 121856
  %v273 = vsel %vm271, %v263, 0
  %v276 = vsel %vm271, %v264, 0
  %v279 = vsel %vm271, %v265, 0
  %v282 = vsel %vm271, %v266, 0
  %v285 = vsel %vm271, %v267, 0
  %v288 = vsel %vm271, %v268, 0
  %v291 = vsel %vm271, %v269, 0
  %v294 = vsel %vm271, %v270, 0
  %vm296 = vcmask 1046528
  %v298 = vsel %vm296, %v262, 0
  %300 = vmatprep.subr.mxu0 0.0
  %301 = vmatpush1.msra.mxu0 %v261
  %302 = vmatprep.subr.mxu0 0.0
  %303 = vmatpush1.msra.mxu0 %v298
  %304 = vmatprep.subr.mxu0 0.0
  %305 = vmatpush1.msra.mxu0 0.0
  %306 = vmatprep.subr.mxu0 0.0
  %307 = vmatpush1.msra.mxu0 0.0
  %308 = vmatprep.subr.mxu0 0.0
  %309 = vmatpush1.msra.mxu0 0.0
  %310 = vmatprep.subr.mxu0 0.0
  %311 = vmatpush1.msra.mxu0 0.0
  %312 = vmatprep.subr.mxu0 0.0
  %313 = vmatpush1.msra.mxu0 0.0
  %314 = vmatprep.subr.mxu0 0.0
  %315 = vmatpush1.msra.mxu0 0.0
  %316 = vmatprep.subr.mxu0 0.0
  %317 = vmatpush1.msra.mxu0 0.0
  %318 = vmatprep.subr.mxu0 0.0
  %319 = vmatpush1.msra.mxu0 0.0
  %320 = vmatprep.subr.mxu0 0.0
  %321 = vmatpush1.msra.mxu0 0.0
  %322 = vmatprep.subr.mxu0 0.0
  %323 = vmatpush1.msra.mxu0 0.0
  %324 = vmatprep.subr.mxu0 0.0
  %325 = vmatpush1.msra.mxu0 0.0
  %326 = vmatprep.subr.mxu0 0.0
  %327 = vmatpush1.msra.mxu0 0.0
  %328 = vmatprep.subr.mxu0 0.0
  %329 = vmatpush1.msra.mxu0 0.0
  %330 = vmatprep.subr.mxu0 0.0
  %331 = vmatpush1.msra.mxu0 0.0
  %332 = vmatprep.subr.mxu0 0.0
  %333 = vmatpush1.msra.mxu0 0.0
  %334 = vmatprep.subr.mxu0 0.0
  %335 = vmatpush1.msra.mxu0 0.0
  %336 = vmatprep.subr.mxu0 0.0
  %337 = vmatpush1.msra.mxu0 0.0
  %338 = vmatprep.subr.mxu0 0.0
  %339 = vmatpush1.msra.mxu0 0.0
  %340 = vmatprep.subr.mxu0 0.0
  %341 = vmatpush1.msra.mxu0 0.0
  %342 = vmatprep.subr.mxu0 0.0
  %343 = vmatpush1.msra.mxu0 0.0
  %344 = vmatprep.subr.mxu0 0.0
  %345 = vmatpush1.msra.mxu0 0.0
  %346 = vmatprep.subr.mxu0 0.0
  %347 = vmatpush1.msra.mxu0 0.0
  %348 = vmatprep.subr.mxu0 0.0
  %349 = vmatpush1.msra.mxu0 0.0
  %350 = vmatprep.subr.mxu0 0.0
  %351 = vmatpush1.msra.mxu0 0.0
  %352 = vmatprep.subr.mxu0 0.0
  %353 = vmatpush1.msra.mxu0 0.0
  %354 = vmatprep.subr.mxu0 0.0
  %355 = vmatpush1.msra.mxu0 0.0
  %356 = vmatprep.subr.mxu0 0.0
  %357 = vmatpush1.msra.mxu0 0.0
  %358 = vmatprep.subr.mxu0 0.0
  %359 = vmatpush1.msra.mxu0 0.0
  %360 = vmatprep.subr.mxu0 0.0
  %361 = vmatpush1.msra.mxu0 0.0
  %362 = vmatprep.subr.mxu0 0.0
  %363 = vmatpush1.msra.mxu0 0.0
  %364 = vmatprep.mubr.f32.mxu0 0.0
  %365 = vmatmul.mubr.f32.gmra.mrb[0].mxu0 %v273
  %v366 = vpop.f32.mrb[0].mxu0
  %v367 = vadd.f32 0.0, %v366
  %v368 = vpop.f32.mrb[0].mxu0
  %369 = vmatprep.mubr.f32.mxu0 0.0
  %370 = vmatmul.mubr.f32.gmra.mrb[0].mxu0 %v276
  %v371 = vpop.f32.mrb[0].mxu0
  %v372 = vadd.f32 0.0, %v371
  %v373 = vpop.f32.mrb[0].mxu0
  %374 = vmatprep.mubr.f32.mxu0 0.0
  %375 = vmatmul.mubr.f32.gmra.mrb[0].mxu0 %v279
  %v376 = vpop.f32.mrb[0].mxu0
  %v377 = vadd.f32 0.0, %v376
  %v378 = vpop.f32.mrb[0].mxu0
  %379 = vmatprep.mubr.f32.mxu0 0.0
  %380 = vmatmul.mubr.f32.gmra.mrb[0].mxu0 %v282
  %v381 = vpop.f32.mrb[0].mxu0
  %v382 = vadd.f32 0.0, %v381
  %v383 = vpop.f32.mrb[0].mxu0
  %384 = vmatprep.mubr.f32.mxu0 0.0
  %385 = vmatmul.mubr.f32.gmra.mrb[0].mxu0 %v285
  %v386 = vpop.f32.mrb[0].mxu0
  %v387 = vadd.f32 0.0, %v386
  %v388 = vpop.f32.mrb[0].mxu0
  %389 = vmatprep.mubr.f32.mxu0 0.0
  %390 = vmatmul.mubr.f32.gmra.mrb[0].mxu0 %v288
  %v391 = vpop.f32.mrb[0].mxu0
  %v392 = vadd.f32 0.0, %v391
  %v393 = vpop.f32.mrb[0].mxu0
  %394 = vmatprep.mubr.f32.mxu0 0.0
  %395 = vmatmul.mubr.f32.gmra.mrb[0].mxu0 %v291
  %v396 = vpop.f32.mrb[0].mxu0
  %v397 = vadd.f32 0.0, %v396
  %v398 = vpop.f32.mrb[0].mxu0
  %399 = vmatprep.mubr.f32.mxu0 0.0
  %400 = vmatmul.mubr.f32.gmra.mrb[0].mxu0 %v294
  %v401 = vpop.f32.mrb[0].mxu0
  %v402 = vadd.f32 0.0, %v401
  %v403 = vpop.f32.mrb[0].mxu0
  %404 = vdwg.mxu0
  %413 = vrot.lane.b32.xlu0 %v367, 126
  %v414 = vpop.permute.xlu0 %413
  %415 = vrot.lane.b32.xlu0 %v372, 126
  %v416 = vpop.permute.xlu0 %415
  %417 = vrot.lane.b32.xlu0 %v377, 126
  %v418 = vpop.permute.xlu0 %417
  %419 = vrot.lane.b32.xlu0 %v382, 126
  %v420 = vpop.permute.xlu0 %419
  %421 = vrot.lane.b32.xlu0 %v387, 126
  %v422 = vpop.permute.xlu0 %421
  %423 = vrot.lane.b32.xlu0 %v392, 126
  %v424 = vpop.permute.xlu0 %423
  %425 = vrot.lane.b32.xlu0 %v397, 126
  %v426 = vpop.permute.xlu0 %425
  %427 = vrot.lane.b32.xlu0 %v402, 126
  %v428 = vpop.permute.xlu0 %427
  %v437 = vadd.f32 %v367, %v414
  %v438 = vadd.f32 %v372, %v416
  %v439 = vadd.f32 %v377, %v418
  %v440 = vadd.f32 %v382, %v420
  %v441 = vadd.f32 %v387, %v422
  %v442 = vadd.f32 %v392, %v424
  %v443 = vadd.f32 %v397, %v426
  %v444 = vadd.f32 %v402, %v428
  %v445 = vxor.u32 %v437, 2147483648
  %v446 = vxor.u32 %v438, 2147483648
  %v447 = vxor.u32 %v439, 2147483648
  %v448 = vxor.u32 %v440, 2147483648
  %v449 = vxor.u32 %v441, 2147483648
  %v450 = vxor.u32 %v442, 2147483648
  %v451 = vxor.u32 %v443, 2147483648
  %v452 = vxor.u32 %v444, 2147483648
  %v453 = vmul.f32 %v445, 1.442695
  %v454 = vpow.pop %v453
  %v455 = vmul.f32 %v446, 1.442695
  %v456 = vpow.pop %v455
  %v457 = vmul.f32 %v447, 1.442695
  %v458 = vpow.pop %v457
  %v459 = vmul.f32 %v448, 1.442695
  %v460 = vpow.pop %v459
  %v461 = vmul.f32 %v449, 1.442695
  %v462 = vpow.pop %v461
  %v463 = vmul.f32 %v450, 1.442695
  %v464 = vpow.pop %v463
  %v465 = vmul.f32 %v451, 1.442695
  %v466 = vpow.pop %v465
  %v467 = vmul.f32 %v452, 1.442695
  %v468 = vpow.pop %v467
  %v469 = vadd.f32 %v454, 1.0
  %v470 = vadd.f32 %v456, 1.0
  %v471 = vadd.f32 %v458, 1.0
  %v472 = vadd.f32 %v460, 1.0
  %v473 = vadd.f32 %v462, 1.0
  %v474 = vadd.f32 %v464, 1.0
  %v475 = vadd.f32 %v466, 1.0
  %v476 = vadd.f32 %v468, 1.0
  %v477 = vrcp.pop %v469
  %v478 = vmul.f32 1.0, %v477
  %v479 = vrcp.pop %v470
  %v480 = vmul.f32 1.0, %v479
  %v481 = vrcp.pop %v471
  %v482 = vmul.f32 1.0, %v481
  %v483 = vrcp.pop %v472
  %v484 = vmul.f32 1.0, %v483
  %v485 = vrcp.pop %v473
  %v486 = vmul.f32 1.0, %v485
  %v487 = vrcp.pop %v474
  %v488 = vmul.f32 1.0, %v487
  %v489 = vrcp.pop %v475
  %v490 = vmul.f32 1.0, %v489
  %v491 = vrcp.pop %v476
  %v492 = vmul.f32 1.0, %v491
  %494 = vset.pattern.permute.xlu0 0
  %495 = vperm.xlu0 %494, %v478
  %v496 = vpop.permute.xlu0 %495
  %499 = vset.pattern.permute.xlu0 0
  %500 = vperm.xlu0 %499, %v480
  %v501 = vpop.permute.xlu0 %500
  %504 = vset.pattern.permute.xlu0 0
  %505 = vperm.xlu0 %504, %v482
  %v506 = vpop.permute.xlu0 %505
  %509 = vset.pattern.permute.xlu0 0
  %510 = vperm.xlu0 %509, %v484
  %v511 = vpop.permute.xlu0 %510
  %514 = vset.pattern.permute.xlu0 0
  %515 = vperm.xlu0 %514, %v486
  %v516 = vpop.permute.xlu0 %515
  %519 = vset.pattern.permute.xlu0 0
  %520 = vperm.xlu0 %519, %v488
  %v521 = vpop.permute.xlu0 %520
  %524 = vset.pattern.permute.xlu0 0
  %525 = vperm.xlu0 %524, %v490
  %v526 = vpop.permute.xlu0 %525
  %529 = vset.pattern.permute.xlu0 0
  %530 = vperm.xlu0 %529, %v492
  %v531 = vpop.permute.xlu0 %530
  %v533 = vmul.f32 %v14, %v496
  %v534 = vmul.f32 %v15, %v501
  %v535 = vmul.f32 %v16, %v506
  %v536 = vmul.f32 %v17, %v511
  %v537 = vmul.f32 %v18, %v516
  %v538 = vmul.f32 %v19, %v521
  %v539 = vmul.f32 %v20, %v526
  %v540 = vmul.f32 %v21, %v531
  %541 = vst.msk [vmem:[%s3] sm:$0xff] %vm31, %v533
  %542 = vst.msk [vmem:[%s3 + $0x8] sm:$0xff] %vm31, %v534
  %543 = vst.msk [vmem:[%s3 + $0x10] sm:$0xff] %vm31, %v535
  %544 = vst.msk [vmem:[%s3 + $0x18] sm:$0xff] %vm31, %v536
  %545 = vst.msk [vmem:[%s3 + $0x20] sm:$0xff] %vm31, %v537
  %546 = vst.msk [vmem:[%s3 + $0x28] sm:$0xff] %vm31, %v538
  %547 = vst.msk [vmem:[%s3 + $0x30] sm:$0xff] %vm31, %v539
  %548 = vst.msk [vmem:[%s3 + $0x38] sm:$0x3f] %vm53, %v540
  %549 = vset.pattern.permute.xlu0 1
  %550 = vperm.xlu0 %549, %v478
  %v551 = vpop.permute.xlu0 %550
  %553 = vset.pattern.permute.xlu0 1
  %554 = vperm.xlu0 %553, %v480
  %v555 = vpop.permute.xlu0 %554
  %557 = vset.pattern.permute.xlu0 1
  %558 = vperm.xlu0 %557, %v482
  %v559 = vpop.permute.xlu0 %558
  %561 = vset.pattern.permute.xlu0 1
  %562 = vperm.xlu0 %561, %v484
  %v563 = vpop.permute.xlu0 %562
  %565 = vset.pattern.permute.xlu0 1
  %566 = vperm.xlu0 %565, %v486
  %v567 = vpop.permute.xlu0 %566
  %569 = vset.pattern.permute.xlu0 1
  %570 = vperm.xlu0 %569, %v488
  %v571 = vpop.permute.xlu0 %570
  %573 = vset.pattern.permute.xlu0 1
  %574 = vperm.xlu0 %573, %v490
  %v575 = vpop.permute.xlu0 %574
  %577 = vset.pattern.permute.xlu0 1
  %578 = vperm.xlu0 %577, %v492
  %v579 = vpop.permute.xlu0 %578
  %v581 = vmul.f32 %v23, %v551
  %v582 = vmul.f32 %v24, %v555
  %v583 = vmul.f32 %v25, %v559
  %v584 = vmul.f32 %v26, %v563
  %v585 = vmul.f32 %v27, %v567
  %v586 = vmul.f32 %v28, %v571
  %v587 = vmul.f32 %v29, %v575
  %v588 = vmul.f32 %v30, %v579
  %s589 = scalar_lea.vmem %s3, 64
  %590 = vst.msk [vmem:[%s589] sm:$0xff] %vm31, %v581
  %591 = vst.msk [vmem:[%s589 + $0x8] sm:$0xff] %vm31, %v582
  %592 = vst.msk [vmem:[%s589 + $0x10] sm:$0xff] %vm31, %v583
  %593 = vst.msk [vmem:[%s589 + $0x18] sm:$0xff] %vm31, %v584
  %594 = vst.msk [vmem:[%s589 + $0x20] sm:$0xff] %vm31, %v585
  %595 = vst.msk [vmem:[%s589 + $0x28] sm:$0xff] %vm31, %v586
  %596 = vst.msk [vmem:[%s589 + $0x30] sm:$0xff] %vm31, %v587
  %597 = vst.msk [vmem:[%s589 + $0x38] sm:$0x3f] %vm53, %v588
  // Predicated region
  $region14: #{channel_attention.1} parent=0 // pred_check
    _
  $region15: #{channel_attention.1} parent=0 // pred_check_branch
    %599 = sbr.rel (0) target = $region17
  $region16: #{channel_attention.1} parent=0 // pred_region
    _
  $region17: #{channel_attention.1} parent=0 // pred_fallthru
    _
  // Predicated region
  $region18: #{channel_attention.1} parent=0 // pred_check
    _
  $region19: #{channel_attention.1} parent=0 // pred_check_branch
    %601 = sbr.rel (0) target = $region21
  $region20: #{channel_attention.1} parent=0 // pred_region
    _
  $region21: #{channel_attention.1} parent=0 // pred_fallthru
    _

</llo_original>
